<compile_context>
chip_gen: v7x
topology: tpu7x:2x2x1
jax: 0.10.0
libtpu: 0.0.40
codegen_flags: <defaults>
</compile_context>

<pallas_src>
import functools
import math

import jax
import jax.numpy as jnp
from jax import lax
from jax.experimental import pallas as pl
from jax.experimental.pallas import tpu as pltpu


# ----------------------------------------------------------------------------
# Fused kernel: one (batch, row-tile) step.
# ----------------------------------------------------------------------------
def _fused_kernel(TH, Wh,
                  pm_ref,   # (1, 1, K1, Lp)        bf16  im2col patches (+halo row)
                  msk_ref,  # (1, 2, Lp)            f32   [0]=col mask, [1]=bias/halo mask
                  w1_ref,   # (Cmid, K1)            bf16  down-conv weights
                  b1_ref,   # (Cmid, 1)             f32   down-conv bias
                  wt_ref,   # (9*Cpad, Cmid)        bf16  merged transposed-conv taps
                  b2_ref,   # (Cpad, 1)             f32   up-conv bias (padded)
                  o_ref):   # (1, 1, Cpad, 4*TH*Wh) f32   phase-major output slab
    Cpad = b2_ref.shape[0]
    L = TH * Wh

    cmask = msk_ref[0, 0:1, :]   # (1, Lp): 0 at the last column of every y row
    bmask = msk_ref[0, 1:2, :]   # (1, Lp): 0 on the phantom halo row (last tile only)

    # ---- down conv: ONE batched GEMM over all TH+1 y rows of this tile ------
    y = jnp.dot(w1_ref[...], pm_ref[0, 0], preferred_element_type=jnp.float32)
    y = y + b1_ref[...] * bmask            # (Cmid, Lp); phantom halo row -> exactly 0
    yb = y.astype(jnp.bfloat16)

    # ---- transposed conv: ONE merged tap GEMM (all 9 kh/kw taps at once) ----
    t = jnp.dot(wt_ref[...], yb, preferred_element_type=jnp.float32)   # (9*Cpad, Lp)

    g0 = t[0 * 3 * Cpad:1 * 3 * Cpad]      # kw=0 taps (kh blocks of Cpad rows)
    g1 = t[1 * 3 * Cpad:2 * 3 * Cpad]      # kw=1 taps
    g2 = t[2 * 3 * Cpad:3 * 3 * Cpad]      # kw=2 taps

    # kw=0 contributes to odd output columns from y column j+1: shift left by one
    # lane, zeroing each y-row's last column (so nothing leaks across rows).
    zcol = jnp.zeros((3 * Cpad, 1), jnp.float32)
    g0s = jnp.concatenate([g0[:, 1:], zcol], axis=1) * cmask

    def kh(g, k):                          # (Cpad, Lp) block for kernel row k
        return g[k * Cpad:(k + 1) * Cpad]

    def cur(v):                            # contribution from y row i
        return v[:, :L]

    def nxt(v):                            # contribution from y row i+1 (uses halo)
        return v[:, Wh:Wh + L]

    ee = cur(kh(g1, 1))                                        # even row, even col
    eo = cur(kh(g2, 1)) + cur(kh(g0s, 1))                      # even row, odd  col
    oe = cur(kh(g1, 2)) + nxt(kh(g1, 0))                       # odd  row, even col
    oo = (cur(kh(g2, 2)) + cur(kh(g0s, 2))
          + nxt(kh(g2, 0)) + nxt(kh(g0s, 0)))                  # odd  row, odd  col

    slab = jnp.concatenate([ee, eo, oe, oo], axis=1) + b2_ref[...]
    o_ref[0, 0] = slab.astype(o_ref.dtype)


# ----------------------------------------------------------------------------
# Dummy.forward
# ----------------------------------------------------------------------------
def dummy_forward(x, params, *, compute_dtype=jnp.bfloat16):
    """x: (N, Cin, H, W) float32, H and W even. Returns (N, Cout, H, W) float32."""
    w1, b1, w2, b2 = params["w1"], params["b1"], params["w2"], params["b2"]
    N, Cin, H, W = x.shape
    assert H % 2 == 0 and W % 2 == 0
    Cmid = w1.shape[0]                    # 10
    Cout = w2.shape[1]
    Hh, Wh = H // 2, W // 2
    K1 = Cin * 4
    Cpad = ((Cout + 7) // 8) * 8          # pad output channels to a sublane group

    # ---- row-tile size: largest TH (divisor of Hh) within a VMEM budget -----
    def tile_vmem_bytes(th):
        lp = (th + 1) * Wh
        dyn = K1 * lp * 2 + 2 * lp * 4 + Cpad * 4 * th * Wh * 4    # patches+masks+out
        static = Cmid * K1 * 2 + Cmid * 4 + 9 * Cpad * Cmid * 2 + Cpad * 4
        return 2 * dyn + static           # x2: double-buffered pipeline

    budget = 12 * 1024 * 1024             # conservative: fits v5e/v6e/v7x scoped VMEM
    divisors = [d for d in range(Hh, 0, -1) if Hh % d == 0]
    TH = next((d for d in divisors if tile_vmem_bytes(d) <= budget), 1)
    if N == 1 and TH == Hh and Hh > 1:
        # v7x has 2 TensorCores; with no batch parallelism give the 2nd core work.
        TH = next((d for d in divisors if d < Hh), TH)
    n_tiles = Hh // TH
    THp, Lp, L = TH + 1, (TH + 1) * Wh, TH * Wh
    vmem_limit = int(min(48 * 2 ** 20, max(32 * 2 ** 20, 3 * tile_vmem_bytes(TH))))

    # ---- im2col for the 2x2/s2 down conv, + zero halo row, tiled with overlap
    patches = x.reshape(N, Cin, Hh, 2, Wh, 2)
    patches = jnp.transpose(patches, (0, 2, 1, 3, 5, 4)).reshape(N, Hh, K1, Wh)
    patches = jnp.concatenate(
        [patches, jnp.zeros((N, 1, K1, Wh), patches.dtype)], axis=1)   # (N, Hh+1, ..)
    rows = jnp.arange(n_tiles)[:, None] * TH + jnp.arange(THp)[None, :]
    ptiles = jnp.take(patches, rows, axis=1)                   # (N, nt, THp, K1, Wh)
    ptiles = jnp.transpose(ptiles, (0, 1, 3, 2, 4)).reshape(N, n_tiles, K1, Lp)
    ptiles = ptiles.astype(compute_dtype)

    # ---- weights -------------------------------------------------------------
    w1m = w1.reshape(Cmid, K1).astype(compute_dtype)            # (ci,kh,kw) order
    b1c = b1.reshape(Cmid, 1).astype(jnp.float32)

    # merged transposed-conv taps: row index = kw*(3*Cpad) + kh*Cpad + co
    w2t = jnp.transpose(w2, (3, 2, 1, 0))                       # (kw, kh, Cout, Cmid)
    wall = jnp.zeros((3, 3, Cpad, Cmid), jnp.float32).at[:, :, :Cout, :].set(w2t)
    wall = wall.reshape(9 * Cpad, Cmid).astype(compute_dtype)
    b2c = jnp.zeros((Cpad, 1), jnp.float32).at[:Cout, 0].set(b2)

    # ---- per-tile masks (built on host side; no modulo/iota needed in-kernel)
    col = jnp.arange(Lp)
    cmask = (col % Wh != Wh - 1).astype(jnp.float32)            # per-row last column
    bmask_last = (col < L).astype(jnp.float32)                  # kill phantom halo row
    bmask = jnp.tile(jnp.ones((Lp,), jnp.float32), (n_tiles, 1))
    bmask = bmask.at[n_tiles - 1].set(bmask_last)
    masks = jnp.stack([jnp.tile(cmask, (n_tiles, 1)), bmask], axis=1)   # (nt, 2, Lp)

    kernel = functools.partial(_fused_kernel, TH, Wh)
    out_p = pl.pallas_call(
        kernel,
        out_shape=jax.ShapeDtypeStruct((N, n_tiles, Cpad, 4 * L), jnp.float32),
        grid_spec=pltpu.PrefetchScalarGridSpec(
            num_scalar_prefetch=0,
            grid=(N, n_tiles),
            in_specs=[
                pl.BlockSpec((1, 1, K1, Lp), lambda n, t: (n, t, 0, 0)),
                pl.BlockSpec((1, 2, Lp), lambda n, t: (t, 0, 0)),
                pl.BlockSpec((Cmid, K1), lambda n, t: (0, 0)),
                pl.BlockSpec((Cmid, 1), lambda n, t: (0, 0)),
                pl.BlockSpec((9 * Cpad, Cmid), lambda n, t: (0, 0)),
                pl.BlockSpec((Cpad, 1), lambda n, t: (0, 0)),
            ],
            out_specs=pl.BlockSpec((1, 1, Cpad, 4 * L),
                                   lambda n, t: (n, t, 0, 0)),
        ),
        compiler_params=pltpu.CompilerParams(
            dimension_semantics=("parallel", "parallel"),
            vmem_limit_bytes=vmem_limit),
    )(ptiles, masks, w1m, b1c, wall, b2c)

    # phase-major (r, c, i, j) slab -> NCHW; one small XLA transpose + free reshapes.
    out = out_p.reshape(N, n_tiles, Cpad, 2, 2, TH, Wh)
    out = jnp.transpose(out, (0, 2, 1, 5, 3, 6, 4)).reshape(N, Cpad, H, W)
    return out[:, :Cout]


# ----------------------------------------------------------------------------
# Deterministic parameter init (xavier-normal-ish, like random_weights_init)
# ----------------------------------------------------------------------------
def init_params(key, in_dim, out_dim):
    k1, k2, k3, k4 = jax.random.split(key, 4)
    std1 = math.sqrt(2.0 / (in_dim * 4 + 10 * 4))
    w1 = std1 * jax.random.normal(k1, (10, in_dim, 2, 2), jnp.float32)
    b1 = 0.01 * jax.random.normal(k2, (10,), jnp.float32)
    std2 = math.sqrt(2.0 / (out_dim * 9 + 10 * 9))
    w2 = std2 * jax.random.normal(k3, (10, out_dim, 3, 3), jnp.float32)
    b2 = 0.01 * jax.random.normal(k4, (out_dim,), jnp.float32)
    return {"w1": w1, "b1": b1, "w2": w2, "b2": b2}


# ----------------------------------------------------------------------------
# Pure-JAX reference (lax convolutions) for correctness check
# ----------------------------------------------------------------------------
def reference_forward(x, params):
    w1, b1, w2, b2 = params["w1"], params["b1"], params["w2"], params["b2"]
    y = lax.conv_general_dilated(
        x, w1, window_strides=(2, 2), padding="VALID",
        dimension_numbers=("NCHW", "OIHW", "NCHW"),
        precision=lax.Precision.HIGHEST)
    y = y + b1[None, :, None, None]
    # convtranspose(s=2, p=1, op=1, k=3) == dilated conv with flipped/transposed kernel
    wc = jnp.transpose(w2, (1, 0, 2, 3))[:, :, ::-1, ::-1]
    out = lax.conv_general_dilated(
        y, wc, window_strides=(1, 1), padding=[(1, 2), (1, 2)],
        lhs_dilation=(2, 2),
        dimension_numbers=("NCHW", "OIHW", "NCHW"),
        precision=lax.Precision.HIGHEST)
    return out + b2[None, :, None, None]


if __name__ == "__main__":
    in_dim, out_dim = 4, 3
    batch, H, W = 2, 16, 16

    key = jax.random.PRNGKey(0)
    kx, kp = jax.random.split(key)
    x = jax.random.normal(kx, (batch, in_dim, H, W), jnp.float32)
    params = init_params(kp, in_dim, out_dim)

    fwd = jax.jit(dummy_forward)
    out = jax.block_until_ready(fwd(x, params))
    assert out.shape == (batch, out_dim, H, W), out.shape

    ref = jax.block_until_ready(reference_forward(x, params))
    max_err = float(jnp.max(jnp.abs(out - ref)))
    # bf16 GEMM operands (incl. the intermediate y) with f32 accumulation
    assert jnp.allclose(out, ref, rtol=3e-2, atol=3e-2), max_err

    print("KERNEL_OK")
</pallas_src>

<mosaic_0001>
module attributes {stable_mosaic.version = 11 : i64} {
  func.func @_fused_kernel(%arg0: i32, %arg1: i32, %arg2: memref<1x1x16x72xbf16, #tpu.memory_space<vmem>>, %arg3: memref<1x2x72xf32, #tpu.memory_space<vmem>>, %arg4: memref<10x16xbf16, #tpu.memory_space<vmem>>, %arg5: memref<10x1xf32, #tpu.memory_space<vmem>>, %arg6: memref<72x10xbf16, #tpu.memory_space<vmem>>, %arg7: memref<8x1xf32, #tpu.memory_space<vmem>>, %arg8: memref<1x1x8x256xf32, #tpu.memory_space<vmem>>) attributes {dimension_semantics = [#tpu.dimension_semantics<parallel>, #tpu.dimension_semantics<parallel>], iteration_bounds = array<i64: 2, 1>, scalar_prefetch = 0 : i64, scratch_operands = 0 : i64, tpu.core_type = #tpu.core_type<tc>, window_params = [{transform_indices = @transform_0, window_bounds = array<i64: 1, 1, 16, 72>}, {transform_indices = @transform_1, window_bounds = array<i64: 1, 2, 72>}, {pipeline_mode = #tpu.pipeline_mode<synchronous>, transform_indices = @transform_2, window_bounds = array<i64: 10, 16>}, {pipeline_mode = #tpu.pipeline_mode<synchronous>, transform_indices = @transform_3, window_bounds = array<i64: 10, 1>}, {pipeline_mode = #tpu.pipeline_mode<synchronous>, transform_indices = @transform_4, window_bounds = array<i64: 72, 10>}, {pipeline_mode = #tpu.pipeline_mode<synchronous>, transform_indices = @transform_5, window_bounds = array<i64: 8, 1>}, {transform_indices = @transform_6, window_bounds = array<i64: 1, 1, 8, 256>}]} {
    %c0 = arith.constant 0 : index
    %c0_0 = arith.constant 0 : index
    %c0_1 = arith.constant 0 : index
    %0 = vector.load %arg3[%c0, %c0_0, %c0_1] : memref<1x2x72xf32, #tpu.memory_space<vmem>>, vector<1x1x72xf32>
    %1 = vector.shape_cast %0 : vector<1x1x72xf32> to vector<1x72xf32>
    %c0_2 = arith.constant 0 : index
    %c1 = arith.constant 1 : index
    %c0_3 = arith.constant 0 : index
    %2 = vector.load %arg3[%c0_2, %c1, %c0_3] : memref<1x2x72xf32, #tpu.memory_space<vmem>>, vector<1x1x72xf32>
    %3 = vector.shape_cast %2 : vector<1x1x72xf32> to vector<1x72xf32>
    %c0_4 = arith.constant 0 : index
    %c0_5 = arith.constant 0 : index
    %4 = vector.load %arg4[%c0_4, %c0_5] : memref<10x16xbf16, #tpu.memory_space<vmem>>, vector<10x16xbf16>
    %c0_6 = arith.constant 0 : index
    %c0_7 = arith.constant 0 : index
    %c0_8 = arith.constant 0 : index
    %c0_9 = arith.constant 0 : index
    %5 = vector.load %arg2[%c0_6, %c0_7, %c0_8, %c0_9] : memref<1x1x16x72xbf16, #tpu.memory_space<vmem>>, vector<1x1x16x72xbf16>
    %6 = vector.shape_cast %5 : vector<1x1x16x72xbf16> to vector<16x72xbf16>
    %cst = arith.constant dense<0.000000e+00> : vector<10x72xf32>
    %7 = tpu.matmul %4, %6, %cst {dimension_numbers = #tpu.dot_dimension_numbers<[1], [0], [0], [1], [0, 0, 1, 1], [], []>} : vector<10x16xbf16>, vector<16x72xbf16>, vector<10x72xf32> -> vector<10x72xf32>
    %c0_10 = arith.constant 0 : index
    %c0_11 = arith.constant 0 : index
    %8 = vector.load %arg5[%c0_10, %c0_11] : memref<10x1xf32, #tpu.memory_space<vmem>>, vector<10x1xf32>
    %9 = vector.broadcast %8 : vector<10x1xf32> to vector<10x72xf32>
    %10 = vector.broadcast %3 : vector<1x72xf32> to vector<10x72xf32>
    %11 = arith.mulf %9, %10 : vector<10x72xf32>
    %12 = arith.addf %7, %11 : vector<10x72xf32>
    %13 = arith.truncf %12 : vector<10x72xf32> to vector<10x72xbf16>
    %c0_12 = arith.constant 0 : index
    %c0_13 = arith.constant 0 : index
    %14 = vector.load %arg6[%c0_12, %c0_13] : memref<72x10xbf16, #tpu.memory_space<vmem>>, vector<72x10xbf16>
    %cst_14 = arith.constant dense<0.000000e+00> : vector<72x72xf32>
    %15 = tpu.matmul %14, %13, %cst_14 {dimension_numbers = #tpu.dot_dimension_numbers<[1], [0], [0], [1], [0, 0, 1, 1], [], []>} : vector<72x10xbf16>, vector<10x72xbf16>, vector<72x72xf32> -> vector<72x72xf32>
    %16 = vector.extract_strided_slice %15 {offsets = [0, 0], sizes = [24, 72], strides = [1, 1]} : vector<72x72xf32> to vector<24x72xf32>
    %17 = vector.extract_strided_slice %15 {offsets = [24, 0], sizes = [24, 72], strides = [1, 1]} : vector<72x72xf32> to vector<24x72xf32>
    %18 = vector.extract_strided_slice %15 {offsets = [48, 0], sizes = [24, 72], strides = [1, 1]} : vector<72x72xf32> to vector<24x72xf32>
    %cst_15 = arith.constant 0.000000e+00 : f32
    %19 = vector.broadcast %cst_15 : f32 to vector<24x1xf32>
    %20 = vector.extract_strided_slice %16 {offsets = [0, 1], sizes = [24, 71], strides = [1, 1]} : vector<24x72xf32> to vector<24x71xf32>
    %21 = tpu.concatenate %20, %19 in 1 : vector<24x71xf32>, vector<24x1xf32> -> vector<24x72xf32>
    %22 = vector.broadcast %1 : vector<1x72xf32> to vector<24x72xf32>
    %23 = arith.mulf %21, %22 : vector<24x72xf32>
    %24 = vector.extract_strided_slice %17 {offsets = [8, 0], sizes = [8, 72], strides = [1, 1]} : vector<24x72xf32> to vector<8x72xf32>
    %25 = vector.extract_strided_slice %24 {offsets = [0, 0], sizes = [8, 64], strides = [1, 1]} : vector<8x72xf32> to vector<8x64xf32>
    %26 = vector.extract_strided_slice %18 {offsets = [8, 0], sizes = [8, 72], strides = [1, 1]} : vector<24x72xf32> to vector<8x72xf32>
    %27 = vector.extract_strided_slice %26 {offsets = [0, 0], sizes = [8, 64], strides = [1, 1]} : vector<8x72xf32> to vector<8x64xf32>
    %28 = vector.extract_strided_slice %23 {offsets = [8, 0], sizes = [8, 72], strides = [1, 1]} : vector<24x72xf32> to vector<8x72xf32>
    %29 = vector.extract_strided_slice %28 {offsets = [0, 0], sizes = [8, 64], strides = [1, 1]} : vector<8x72xf32> to vector<8x64xf32>
    %30 = arith.addf %27, %29 : vector<8x64xf32>
    %31 = vector.extract_strided_slice %17 {offsets = [16, 0], sizes = [8, 72], strides = [1, 1]} : vector<24x72xf32> to vector<8x72xf32>
    %32 = vector.extract_strided_slice %31 {offsets = [0, 0], sizes = [8, 64], strides = [1, 1]} : vector<8x72xf32> to vector<8x64xf32>
    %33 = vector.extract_strided_slice %17 {offsets = [0, 0], sizes = [8, 72], strides = [1, 1]} : vector<24x72xf32> to vector<8x72xf32>
    %34 = vector.extract_strided_slice %33 {offsets = [0, 8], sizes = [8, 64], strides = [1, 1]} : vector<8x72xf32> to vector<8x64xf32>
    %35 = arith.addf %32, %34 : vector<8x64xf32>
    %36 = vector.extract_strided_slice %18 {offsets = [16, 0], sizes = [8, 72], strides = [1, 1]} : vector<24x72xf32> to vector<8x72xf32>
    %37 = vector.extract_strided_slice %36 {offsets = [0, 0], sizes = [8, 64], strides = [1, 1]} : vector<8x72xf32> to vector<8x64xf32>
    %38 = vector.extract_strided_slice %23 {offsets = [16, 0], sizes = [8, 72], strides = [1, 1]} : vector<24x72xf32> to vector<8x72xf32>
    %39 = vector.extract_strided_slice %38 {offsets = [0, 0], sizes = [8, 64], strides = [1, 1]} : vector<8x72xf32> to vector<8x64xf32>
    %40 = arith.addf %37, %39 : vector<8x64xf32>
    %41 = vector.extract_strided_slice %18 {offsets = [0, 0], sizes = [8, 72], strides = [1, 1]} : vector<24x72xf32> to vector<8x72xf32>
    %42 = vector.extract_strided_slice %41 {offsets = [0, 8], sizes = [8, 64], strides = [1, 1]} : vector<8x72xf32> to vector<8x64xf32>
    %43 = arith.addf %40, %42 : vector<8x64xf32>
    %44 = vector.extract_strided_slice %23 {offsets = [0, 0], sizes = [8, 72], strides = [1, 1]} : vector<24x72xf32> to vector<8x72xf32>
    %45 = vector.extract_strided_slice %44 {offsets = [0, 8], sizes = [8, 64], strides = [1, 1]} : vector<8x72xf32> to vector<8x64xf32>
    %46 = arith.addf %43, %45 : vector<8x64xf32>
    %47 = tpu.concatenate %25, %30, %35, %46 in 1 : vector<8x64xf32>, vector<8x64xf32>, vector<8x64xf32>, vector<8x64xf32> -> vector<8x256xf32>
    %c0_16 = arith.constant 0 : index
    %c0_17 = arith.constant 0 : index
    %48 = vector.load %arg7[%c0_16, %c0_17] : memref<8x1xf32, #tpu.memory_space<vmem>>, vector<8x1xf32>
    %49 = vector.broadcast %48 : vector<8x1xf32> to vector<8x256xf32>
    %50 = arith.addf %47, %49 : vector<8x256xf32>
    %c0_18 = arith.constant 0 : index
    %c0_19 = arith.constant 0 : index
    %c0_20 = arith.constant 0 : index
    %c0_21 = arith.constant 0 : index
    %51 = vector.load %arg8[%c0_18, %c0_19, %c0_20, %c0_21] : memref<1x1x8x256xf32, #tpu.memory_space<vmem>>, vector<1x1x8x256xf32>
    %52 = vector.shape_cast %51 : vector<1x1x8x256xf32> to vector<8x256xf32>
    %53 = vector.shape_cast %50 : vector<8x256xf32> to vector<1x1x8x256xf32>
    tpu.vector_store %arg8[%c0_18, %c0_19, %c0_20, %c0_21], %53 {strides = array<i32>} : memref<1x1x8x256xf32, #tpu.memory_space<vmem>>, vector<1x1x8x256xf32>,
    return
  }
  func.func @transform_0(%arg0: i32, %arg1: i32) -> (i32, i32, i32, i32) {
    %c0_i32 = arith.constant 0 : i32
    %c0_i32_0 = arith.constant 0 : i32
    %c0_i32_1 = arith.constant 0 : i32
    return %arg0, %arg1, %c0_i32, %c0_i32_0 : i32, i32, i32, i32
  }
  func.func @transform_1(%arg0: i32, %arg1: i32) -> (i32, i32, i32) {
    %c0_i32 = arith.constant 0 : i32
    %c0_i32_0 = arith.constant 0 : i32
    %c0_i32_1 = arith.constant 0 : i32
    return %arg1, %c0_i32, %c0_i32_0 : i32, i32, i32
  }
  func.func @transform_2(%arg0: i32, %arg1: i32) -> (i32, i32) {
    %c0_i32 = arith.constant 0 : i32
    %c0_i32_0 = arith.constant 0 : i32
    %c0_i32_1 = arith.constant 0 : i32
    return %c0_i32, %c0_i32_0 : i32, i32
  }
  func.func @transform_3(%arg0: i32, %arg1: i32) -> (i32, i32) {
    %c0_i32 = arith.constant 0 : i32
    %c0_i32_0 = arith.constant 0 : i32
    %c0_i32_1 = arith.constant 0 : i32
    return %c0_i32, %c0_i32_0 : i32, i32
  }
  func.func @transform_4(%arg0: i32, %arg1: i32) -> (i32, i32) {
    %c0_i32 = arith.constant 0 : i32
    %c0_i32_0 = arith.constant 0 : i32
    %c0_i32_1 = arith.constant 0 : i32
    return %c0_i32, %c0_i32_0 : i32, i32
  }
  func.func @transform_5(%arg0: i32, %arg1: i32) -> (i32, i32) {
    %c0_i32 = arith.constant 0 : i32
    %c0_i32_0 = arith.constant 0 : i32
    %c0_i32_1 = arith.constant 0 : i32
    return %c0_i32, %c0_i32_0 : i32, i32
  }
  func.func @transform_6(%arg0: i32, %arg1: i32) -> (i32, i32, i32, i32) {
    %c0_i32 = arith.constant 0 : i32
    %c0_i32_0 = arith.constant 0 : i32
    %c0_i32_1 = arith.constant 0 : i32
    return %arg0, %arg1, %c0_i32, %c0_i32_0 : i32, i32, i32, i32
  }
}

</mosaic_0001>

<llo_original>
// kernel: dummy_forward.1
$region0: #{dummy_forward.1}
  #allocation0 [shape = 'u32[]', space=smem, size = 0x4, offset = 0x4, fixed_abs, tag = 'smem constant byte address 0x4 - core index']
  #allocation1 [shape = 'u32[144,128]{1,0:T(1,128)}', space=vmem, size = 0x12000, scoped, tag = 'internal scratch']
  %s0 = inlined_call_operand.vmem [shape: bf16[2,1,16,72], index: 0, kind: input, shape index: {}]
  %s1 = inlined_call_operand.vmem [shape: f32[1,2,72], index: 1, kind: input, shape index: {}]
  %s2 = inlined_call_operand.vmem [shape: bf16[10,16], index: 2, kind: input, shape index: {}]
  %s3 = inlined_call_operand.vmem [shape: f32[10,1], index: 3, kind: input, shape index: {}]
  %s4 = inlined_call_operand.vmem [shape: bf16[72,10], index: 4, kind: input, shape index: {}]
  %s5 = inlined_call_operand.vmem [shape: f32[8,1], index: 5, kind: input, shape index: {}]
  %s6 = inlined_call_operand.vmem [shape: f32[2,1,8,256], index: 6, kind: output, shape index: {}]
  %s7 = sld [smem:[#allocation0]]
  $region57: #{dummy_forward.1} parent=0
    _
  %s9 = ssub.s32 1, %s7
  %s10 = scalar_select 0, %s9, %s7
  loop: start=0, step=1, limit=4
  $region2: #{dummy_forward.1} parent=0 // loop_pre_header
    _
  $region3: #{dummy_forward.1} parent=0 // loop_header
    %s12 = sphi 0, %s16
    %p13 = scmp.ge.s32.totalorder %s12, 4
    %s19 = sphi 0, %s31
    %s20 = sphi 0, %s27
    %s21 = sphi 0, %s19
    %s22 = sphi 0, %s20
    %s23 = sphi 0, %s21
    %s24 = sphi 0, %s22
    %s36 = sphi 0, %s38
    %s39 = sphi 0, %s36
    %s40 = sphi 0, %s39
    %s56 = sphi 0, %s40
    %s62 = sphi 0, %s64
    %s65 = sphi 0, %s62
    %s66 = sphi 0, %s65
    %s82 = sphi 0, %s66
    %s86 = sphi 0, %s86
    %s88 = sphi 0, %s86
    %s89 = sphi 0, %s88
    %s103 = sphi 0, %s89
    %s107 = sphi 0, %s107
    %s109 = sphi 0, %s107
    %s110 = sphi 0, %s109
    %s124 = sphi 0, %s110
    %s128 = sphi 0, %s128
    %s130 = sphi 0, %s128
    %s131 = sphi 0, %s130
    %s145 = sphi 0, %s131
    %s149 = sphi 0, %s149
    %s151 = sphi 0, %s149
    %s152 = sphi 0, %s151
    %s166 = sphi 0, %s152
    %s174 = sphi 0, %s176
    %s177 = sphi 0, %s174
    %s178 = sphi 0, %s177
    %s194 = sphi 0, %s178
  $region4: #{dummy_forward.1} parent=0 // loop_header_branch
    %15 = sbr.rel (%p13) target = $region8
  $region5: #{dummy_forward.1} parent=0 // loop_body
    %s17 = ssub.s32 %s12, 1
    %s18 = ssub.s32 %s12, 2
    %s25 = sadd.s32 1, %s20
    %p26 = scmp.ge.s32.totalorder %s25, 1
    %s27 = scalar_select %p26, 0, %s25
    %s28 = sadd.s32 1, %s19
    %s29 = scalar_select %p26, %s28, %s19
    %p30 = scmp.ge.s32.totalorder %s29, 2
    %s31 = scalar_select %p30, 0, %s29
    %s32 = ssub.s32 %s19, %s31
    %s33 = ssub.s32 %s20, %s27
    %s34 = sor.u32 %s32, %s33
    %p35 = scmp.eq.s32.totalorder %s34, 0
    %s37 = sadd.s32 %s36, 1
    %s38 = scalar_select %p35, %s36, %s37
    %p41 = pneg %p35
    %p42 = scmp.eq.s32.totalorder %s12, 1
    %p43 = por %p41, %p42
    %p44 = scmp.ne.s32.totalorder %s36, %s39
    %p45 = scmp.eq.s32.totalorder %s12, 0
    %p46 = por %p44, %p45
    %p47 = scmp.ne.s32.totalorder %s36, %s39
    %p48 = scmp.eq.s32.totalorder %s17, 1
    %p49 = por %p47, %p48
    %p50 = scmp.ne.s32.totalorder %s39, %s40
    %p51 = scmp.eq.s32.totalorder %s17, 0
    %p52 = por %p50, %p51
    %p53 = scmp.ne.s32.totalorder %s39, %s40
    %p54 = scmp.eq.s32.totalorder %s18, 1
    %p55 = por %p53, %p54
    %p57 = scmp.ne.s32.totalorder %s40, %s56
    %p58 = scmp.eq.s32.totalorder %s18, 0
    %p59 = por %p57, %p58
    %s60 = ssub.s32 %s20, %s27
    %p61 = scmp.eq.s32.totalorder %s60, 0
    %s63 = sadd.s32 %s62, 1
    %s64 = scalar_select %p61, %s62, %s63
    %p67 = pneg %p61
    %p68 = scmp.eq.s32.totalorder %s12, 1
    %p69 = por %p67, %p68
    %p70 = scmp.ne.s32.totalorder %s62, %s65
    %p71 = scmp.eq.s32.totalorder %s12, 0
    %p72 = por %p70, %p71
    %p73 = scmp.ne.s32.totalorder %s62, %s65
    %p74 = scmp.eq.s32.totalorder %s17, 1
    %p75 = por %p73, %p74
    %p76 = scmp.ne.s32.totalorder %s65, %s66
    %p77 = scmp.eq.s32.totalorder %s17, 0
    %p78 = por %p76, %p77
    %p79 = scmp.ne.s32.totalorder %s65, %s66
    %p80 = scmp.eq.s32.totalorder %s18, 1
    %p81 = por %p79, %p80
    %p83 = scmp.ne.s32.totalorder %s66, %s82
    %p84 = scmp.eq.s32.totalorder %s18, 0
    %p85 = por %p83, %p84
    %s87 = sadd.s32 %s86, 1
    %p90 = scmp.eq.s32.totalorder %s12, 1
    %p91 = scmp.ne.s32.totalorder %s86, %s88
    %p92 = scmp.eq.s32.totalorder %s12, 0
    %p93 = por %p91, %p92
    %p94 = scmp.ne.s32.totalorder %s86, %s88
    %p95 = scmp.eq.s32.totalorder %s17, 1
    %p96 = por %p94, %p95
    %p97 = scmp.ne.s32.totalorder %s88, %s89
    %p98 = scmp.eq.s32.totalorder %s17, 0
    %p99 = por %p97, %p98
    %p100 = scmp.ne.s32.totalorder %s88, %s89
    %p101 = scmp.eq.s32.totalorder %s18, 1
    %p102 = por %p100, %p101
    %p104 = scmp.ne.s32.totalorder %s89, %s103
    %p105 = scmp.eq.s32.totalorder %s18, 0
    %p106 = por %p104, %p105
    %s108 = sadd.s32 %s107, 1
    %p111 = scmp.eq.s32.totalorder %s12, 1
    %p112 = scmp.ne.s32.totalorder %s107, %s109
    %p113 = scmp.eq.s32.totalorder %s12, 0
    %p114 = por %p112, %p113
    %p115 = scmp.ne.s32.totalorder %s107, %s109
    %p116 = scmp.eq.s32.totalorder %s17, 1
    %p117 = por %p115, %p116
    %p118 = scmp.ne.s32.totalorder %s109, %s110
    %p119 = scmp.eq.s32.totalorder %s17, 0
    %p120 = por %p118, %p119
    %p121 = scmp.ne.s32.totalorder %s109, %s110
    %p122 = scmp.eq.s32.totalorder %s18, 1
    %p123 = por %p121, %p122
    %p125 = scmp.ne.s32.totalorder %s110, %s124
    %p126 = scmp.eq.s32.totalorder %s18, 0
    %p127 = por %p125, %p126
    %s129 = sadd.s32 %s128, 1
    %p132 = scmp.eq.s32.totalorder %s12, 1
    %p133 = scmp.ne.s32.totalorder %s128, %s130
    %p134 = scmp.eq.s32.totalorder %s12, 0
    %p135 = por %p133, %p134
    %p136 = scmp.ne.s32.totalorder %s128, %s130
    %p137 = scmp.eq.s32.totalorder %s17, 1
    %p138 = por %p136, %p137
    %p139 = scmp.ne.s32.totalorder %s130, %s131
    %p140 = scmp.eq.s32.totalorder %s17, 0
    %p141 = por %p139, %p140
    %p142 = scmp.ne.s32.totalorder %s130, %s131
    %p143 = scmp.eq.s32.totalorder %s18, 1
    %p144 = por %p142, %p143
    %p146 = scmp.ne.s32.totalorder %s131, %s145
    %p147 = scmp.eq.s32.totalorder %s18, 0
    %p148 = por %p146, %p147
    %s150 = sadd.s32 %s149, 1
    %p153 = scmp.eq.s32.totalorder %s12, 1
    %p154 = scmp.ne.s32.totalorder %s149, %s151
    %p155 = scmp.eq.s32.totalorder %s12, 0
    %p156 = por %p154, %p155
    %p157 = scmp.ne.s32.totalorder %s149, %s151
    %p158 = scmp.eq.s32.totalorder %s17, 1
    %p159 = por %p157, %p158
    %p160 = scmp.ne.s32.totalorder %s151, %s152
    %p161 = scmp.eq.s32.totalorder %s17, 0
    %p162 = por %p160, %p161
    %p163 = scmp.ne.s32.totalorder %s151, %s152
    %p164 = scmp.eq.s32.totalorder %s18, 1
    %p165 = por %p163, %p164
    %p167 = scmp.ne.s32.totalorder %s152, %s166
    %p168 = scmp.eq.s32.totalorder %s18, 0
    %p169 = por %p167, %p168
    %s170 = ssub.s32 %s19, %s31
    %s171 = ssub.s32 %s20, %s27
    %s172 = sor.u32 %s170, %s171
    %p173 = scmp.eq.s32.totalorder %s172, 0
    %s175 = sadd.s32 %s174, 1
    %s176 = scalar_select %p173, %s174, %s175
    %p179 = pneg %p173
    %p180 = scmp.eq.s32.totalorder %s12, 1
    %p181 = por %p179, %p180
    %p182 = scmp.ne.s32.totalorder %s174, %s177
    %p183 = scmp.eq.s32.totalorder %s12, 0
    %p184 = por %p182, %p183
    %p185 = scmp.ne.s32.totalorder %s174, %s177
    %p186 = scmp.eq.s32.totalorder %s17, 1
    %p187 = por %p185, %p186
    %p188 = scmp.ne.s32.totalorder %s177, %s178
    %p189 = scmp.eq.s32.totalorder %s17, 0
    %p190 = por %p188, %p189
    %p191 = scmp.ne.s32.totalorder %s177, %s178
    %p192 = scmp.eq.s32.totalorder %s18, 1
    %p193 = por %p191, %p192
    %p195 = scmp.ne.s32.totalorder %s178, %s194
    %p196 = scmp.eq.s32.totalorder %s18, 0
    %p197 = por %p195, %p196
    %p198 = scmp.le.s32.totalorder 1, %s12
    %p199 = scmp.lt.s32.totalorder %s12, 3
    %p200 = pnand %p198, %p199
    %p201 = pneg %p200
    // Predicated region
    $region9: #{dummy_forward.1} parent=5 // pred_check
      _
    $region10: #{dummy_forward.1} parent=5 // pred_check_branch
      %203 = sbr.rel (%p200) target = $region12
    $region11: #{dummy_forward.1} parent=5 // pred_region
      %s204 = ssub.s32 %s12, 1
      // Predicated region
      $region13: #{dummy_forward.1} parent=11 // pred_check
        %p205 = pneg %p78
      $region14: #{dummy_forward.1} parent=11 // pred_check_branch
        %207 = sbr.rel (%p205) target = $region16
      $region15: #{dummy_forward.1} parent=11 // pred_region
        %p208 = scmp.lt.s32.totalorder %s22, 0
        %s209 = scalar_select %p208, %s22, 0
        %s210 = smul.addr %s209, 2
        %s211 = scalar_lea.vmem %s1, %s210
      $region16: #{dummy_forward.1} parent=11 // pred_fallthru
        _
      // Predicated region
      $region17: #{dummy_forward.1} parent=11 // pred_check
        %p212 = pneg %p99
      $region18: #{dummy_forward.1} parent=11 // pred_check_branch
        %214 = sbr.rel (%p212) target = $region20
      $region19: #{dummy_forward.1} parent=11 // pred_region
        _
      $region20: #{dummy_forward.1} parent=11 // pred_fallthru
        _
      // Predicated region
      $region21: #{dummy_forward.1} parent=11 // pred_check
        %p215 = pneg %p120
      $region22: #{dummy_forward.1} parent=11 // pred_check_branch
        %217 = sbr.rel (%p215) target = $region24
      $region23: #{dummy_forward.1} parent=11 // pred_region
        _
      $region24: #{dummy_forward.1} parent=11 // pred_fallthru
        _
      // Predicated region
      $region25: #{dummy_forward.1} parent=11 // pred_check
        %p218 = pneg %p141
      $region26: #{dummy_forward.1} parent=11 // pred_check_branch
        %220 = sbr.rel (%p218) target = $region28
      $region27: #{dummy_forward.1} parent=11 // pred_region
        _
      $region28: #{dummy_forward.1} parent=11 // pred_fallthru
        _
      // Predicated region
      $region29: #{dummy_forward.1} parent=11 // pred_check
        %p221 = pneg %p162
      $region30: #{dummy_forward.1} parent=11 // pred_check_branch
        %223 = sbr.rel (%p221) target = $region32
      $region31: #{dummy_forward.1} parent=11 // pred_region
        _
      $region32: #{dummy_forward.1} parent=11 // pred_fallthru
        _
    $region12: #{dummy_forward.1} parent=5 // pred_fallthru
      _
    %p224 = scmp.lt.s32.totalorder %s12, 2
    // Predicated region
    $region33: #{dummy_forward.1} parent=5 // pred_check
      %p225 = pneg %p224
    $region34: #{dummy_forward.1} parent=5 // pred_check_branch
      %227 = sbr.rel (%p225) target = $region36
    $region35: #{dummy_forward.1} parent=5 // pred_region
      // Predicated region
      $region37: #{dummy_forward.1} parent=35 // pred_check
        %p228 = pneg %p46
      $region38: #{dummy_forward.1} parent=35 // pred_check_branch
        %230 = sbr.rel (%p228) target = $region40
      $region39: #{dummy_forward.1} parent=35 // pred_region
        %p231 = scmp.lt.s32.totalorder %s19, 1
        %s232 = scalar_select %p231, %s19, 1
        %p233 = scmp.lt.s32.totalorder %s20, 0
        %s234 = scalar_select %p233, %s20, 0
        %s235 = smul.addr %s234, 2
        %s236 = smul.addr %s232, 2
        %s237 = sadd.s32 %s235, %s236
        %s238 = smul.addr %s237, 4
        %s239 = scalar_lea.vmem %s0, %s238
      $region40: #{dummy_forward.1} parent=35 // pred_fallthru
        _
    $region36: #{dummy_forward.1} parent=5 // pred_fallthru
      _
    %p240 = scmp.le.s32.totalorder 1, %s12
    %p241 = scmp.lt.s32.totalorder %s12, 3
    %p242 = pnand %p240, %p241
    %p243 = pneg %p242
    // Predicated region
    $region41: #{dummy_forward.1} parent=5 // pred_check
      _
    $region42: #{dummy_forward.1} parent=5 // pred_check_branch
      %245 = sbr.rel (%p242) target = $region44
    $region43: #{dummy_forward.1} parent=5 // pred_region
      %s246 = ssub.s32 %s12, 1
      %p247 = scmp.lt.s32.totalorder %s21, 1
      %s248 = scalar_select %p247, %s21, 1
      %p249 = scmp.lt.s32.totalorder %s22, 0
      %s250 = scalar_select %p249, %s22, 0
      %s251 = smul.addr %s250, 2
      %s252 = smul.addr %s248, 2
      %s253 = sadd.s32 %s251, %s252
      %s254 = smul.addr %s253, 4
      %s255 = scalar_lea.vmem %s0, %s254
      %p256 = pneg %p52
      %p257 = pneg %p49
      %p258 = scmp.lt.s32.totalorder %s22, 0
      %s259 = scalar_select %p258, %s22, 0
      %s260 = smul.addr %s259, 2
      %s261 = scalar_lea.vmem %s1, %s260
      %p262 = pneg %p78
      %p263 = pneg %p75
      %p264 = pneg %p99
      %p265 = pneg %p96
      %p266 = pneg %p120
      %p267 = pneg %p117
      %p268 = pneg %p141
      %p269 = pneg %p138
      %p270 = pneg %p162
      %p271 = pneg %p159
      %p272 = pneg %p190
      %p273 = pneg %p187
      %p274 = scmp.lt.s32.totalorder %s21, 1
      %s275 = scalar_select %p274, %s21, 1
      %p276 = scmp.lt.s32.totalorder %s22, 0
      %s277 = scalar_select %p276, %s22, 0
      %s278 = smul.addr %s277, 2
      %s279 = smul.addr %s275, 2
      %s280 = sadd.s32 %s278, %s279
      %s281 = smul.addr %s280, 8
      %s282 = scalar_lea.vmem %s6, %s281
      %p283 = scmp.lt.s32.totalorder %s21, 1
      %s284 = scalar_select %p283, %s21, 1
      %p285 = scmp.lt.s32.totalorder %s22, 0
      %s286 = scalar_select %p285, %s22, 0
      %s287 = smul.addr %s286, 2
      %s288 = smul.addr %s284, 2
      %s289 = sadd.s32 %s287, %s288
      %s290 = smul.addr %s289, 4
      %s291 = scalar_lea.vmem %s0, %s290
      %p292 = scmp.lt.s32.totalorder %s22, 0
      %s293 = scalar_select %p292, %s22, 0
      %s294 = smul.addr %s293, 2
      %s295 = scalar_lea.vmem %s1, %s294
      %p296 = scmp.lt.s32.totalorder %s21, 1
      %s297 = scalar_select %p296, %s21, 1
      %p298 = scmp.lt.s32.totalorder %s22, 0
      %s299 = scalar_select %p298, %s22, 0
      %s300 = smul.addr %s299, 2
      %s301 = smul.addr %s297, 2
      %s302 = sadd.s32 %s300, %s301
      %s303 = smul.addr %s302, 8
      %s304 = scalar_lea.vmem %s6, %s303
      %v306 = vld [vmem:[%s295] sm:$0x1]
      %v307 = vld [vmem:[%s295 + $0x1] sm:$0x1]
      %v308 = vld [vmem:[%s2] sm:$0xf]
      %v309 = vld [vmem:[%s2 + $0x4] sm:$0x1]
      %v310 = vld [vmem:[%s291] sm:$0xf]
      %v311 = vld [vmem:[%s291 + $0x4] sm:$0xf]
      %v312 = vld [vmem:[%s3] sm:$0xff]
      %v313 = vld [vmem:[%s3 + $0x8] sm:$0x3]
      %315 = vset.pattern.permute.xlu0 0
      %316 = vperm.xlu0 %315, %v312
      %v317 = vpop.permute.xlu0 %316
      %320 = vset.pattern.permute.xlu0 0
      %321 = vperm.xlu0 %320, %v313
      %v322 = vpop.permute.xlu0 %321
      %v324 = vlaneseq
      %v325 = vshrl.u32 %v324, 7
      %v326 = vsub.s32 0, %v325
      %v327 = vrot.slane %v307, %v326
      %v328 = vmul.f32 %v317, %v327
      %v329 = vmul.f32 %v322, %v327
      %v332 = vunpack.c.l.b16 %v308
      %v333 = vunpack.c.l.b16 %v309
      %v334 = vpack.c.b16 %v333, %v332
      %v337 = vunpack.c.l.b16 %v310
      %v338 = vunpack.c.l.b16 %v311
      %v339 = vpack.c.b16 %v338, %v337
      %vm341 = vcmask 130048
      %v343 = vsel %vm341, %v334, 0
      %345 = vmatprep.subr.bf16.mxu0 0
      %346 = vmatpush1.bf16.msra.mxu0 %v339
      %347 = vmatprep.subr.bf16.mxu0 0
      %348 = vmatpush1.bf16.msra.mxu0 0
      %349 = vmatprep.subr.bf16.mxu0 0
      %350 = vmatpush1.bf16.msra.mxu0 0
      %351 = vmatprep.subr.bf16.mxu0 0
      %352 = vmatpush1.bf16.msra.mxu0 0
      %353 = vmatprep.subr.bf16.mxu0 0
      %354 = vmatpush1.bf16.msra.mxu0 0
      %355 = vmatprep.subr.bf16.mxu0 0
      %356 = vmatpush1.bf16.msra.mxu0 0
      %357 = vmatprep.subr.bf16.mxu0 0
      %358 = vmatpush1.bf16.msra.mxu0 0
      %359 = vmatprep.subr.bf16.mxu0 0
      %360 = vmatpush1.bf16.msra.mxu0 0
      %361 = vmatprep.subr.bf16.mxu0 0
      %362 = vmatpush1.bf16.msra.mxu0 0
      %363 = vmatprep.subr.bf16.mxu0 0
      %364 = vmatpush1.bf16.msra.mxu0 0
      %365 = vmatprep.subr.bf16.mxu0 0
      %366 = vmatpush1.bf16.msra.mxu0 0
      %367 = vmatprep.subr.bf16.mxu0 0
      %368 = vmatpush1.bf16.msra.mxu0 0
      %369 = vmatprep.subr.bf16.mxu0 0
      %370 = vmatpush1.bf16.msra.mxu0 0
      %371 = vmatprep.subr.bf16.mxu0 0
      %372 = vmatpush1.bf16.msra.mxu0 0
      %373 = vmatprep.subr.bf16.mxu0 0
      %374 = vmatpush1.bf16.msra.mxu0 0
      %375 = vmatprep.subr.bf16.mxu0 0
      %376 = vmatpush1.bf16.msra.mxu0 0
      %377 = vmatprep.mubr.bf16.mxu0 0
      %378 = vmatmul.mubr.bf16.gmra.mrb[0].mxu0 %v343
      %v379 = vpop.f32.mrb[0].mxu0
      %v380 = vadd.f32 %v328, %v379
      %v381 = vpop.f32.mrb[0].mxu0
      %v382 = vpop.f32.mrb[0].mxu0
      %v383 = vadd.f32 %v329, %v382
      %v384 = vpop.f32.mrb[0].mxu0
      %385 = vdwg.mxu0
      %v386 = vpack.c.bf16 %v383, %v380
      %v387 = vld [vmem:[%s4] sm:$0xf]
      %v388 = vld [vmem:[%s4 + $0x4] sm:$0xf]
      %v389 = vld [vmem:[%s4 + $0x8] sm:$0xf]
      %v390 = vld [vmem:[%s4 + $0xc] sm:$0xf]
      %v391 = vld [vmem:[%s4 + $0x10] sm:$0xf]
      %v392 = vld [vmem:[%s4 + $0x14] sm:$0xf]
      %v393 = vld [vmem:[%s4 + $0x18] sm:$0xf]
      %v394 = vld [vmem:[%s4 + $0x1c] sm:$0xf]
      %v395 = vld [vmem:[%s4 + $0x20] sm:$0xf]
      %v405 = vunpack.c.l.b16 %v387
      %v406 = vunpack.c.l.b16 %v388
      %v407 = vunpack.c.l.b16 %v389
      %v408 = vunpack.c.l.b16 %v390
      %v409 = vunpack.c.l.b16 %v391
      %v410 = vunpack.c.l.b16 %v392
      %v411 = vunpack.c.l.b16 %v393
      %v412 = vunpack.c.l.b16 %v394
      %v413 = vunpack.c.l.b16 %v395
      %v414 = vpack.c.b16 %v406, %v405
      %v415 = vpack.c.b16 %v408, %v407
      %v416 = vpack.c.b16 %v410, %v409
      %v417 = vpack.c.b16 %v412, %v411
      %v418 = vpack.c.b16 %v413, %v413
      %vm419 = vcmask 80896
      %v421 = vsel %vm419, %v414, 0
      %v424 = vsel %vm419, %v415, 0
      %v427 = vsel %vm419, %v416, 0
      %v430 = vsel %vm419, %v417, 0
      %v433 = vsel %vm419, %v418, 0
      %vm435 = vcmask 1044480
      %v437 = vsel %vm435, %v386, 0
      %439 = vmatprep.subr.bf16.mxu0 0
      %440 = vmatpush1.bf16.msra.mxu0 %v437
      %441 = vmatprep.subr.bf16.mxu0 0
      %442 = vmatpush1.bf16.msra.mxu0 0
      %443 = vmatprep.subr.bf16.mxu0 0
      %444 = vmatpush1.bf16.msra.mxu0 0
      %445 = vmatprep.subr.bf16.mxu0 0
      %446 = vmatpush1.bf16.msra.mxu0 0
      %447 = vmatprep.subr.bf16.mxu0 0
      %448 = vmatpush1.bf16.msra.mxu0 0
      %449 = vmatprep.subr.bf16.mxu0 0
      %450 = vmatpush1.bf16.msra.mxu0 0
      %451 = vmatprep.subr.bf16.mxu0 0
      %452 = vmatpush1.bf16.msra.mxu0 0
      %453 = vmatprep.subr.bf16.mxu0 0
      %454 = vmatpush1.bf16.msra.mxu0 0
      %455 = vmatprep.subr.bf16.mxu0 0
      %456 = vmatpush1.bf16.msra.mxu0 0
      %457 = vmatprep.subr.bf16.mxu0 0
      %458 = vmatpush1.bf16.msra.mxu0 0
      %459 = vmatprep.subr.bf16.mxu0 0
      %460 = vmatpush1.bf16.msra.mxu0 0
      %461 = vmatprep.subr.bf16.mxu0 0
      %462 = vmatpush1.bf16.msra.mxu0 0
      %463 = vmatprep.subr.bf16.mxu0 0
      %464 = vmatpush1.bf16.msra.mxu0 0
      %465 = vmatprep.subr.bf16.mxu0 0
      %466 = vmatpush1.bf16.msra.mxu0 0
      %467 = vmatprep.subr.bf16.mxu0 0
      %468 = vmatpush1.bf16.msra.mxu0 0
      %469 = vmatprep.subr.bf16.mxu0 0
      %470 = vmatpush1.bf16.msra.mxu0 0
      %471 = vmatprep.mubr.bf16.mxu0 0
      %472 = vmatmul.mubr.bf16.gmra.mrb[0].mxu0 %v421
      %v473 = vpop.f32.mrb[0].mxu0
      %v474 = vadd.f32 0.0, %v473
      %v475 = vpop.f32.mrb[0].mxu0
      %v476 = vpop.f32.mrb[0].mxu0
      %v477 = vadd.f32 0.0, %v476
      %v478 = vpop.f32.mrb[0].mxu0
      %479 = vmatprep.mubr.bf16.mxu0 0
      %480 = vmatmul.mubr.bf16.gmra.mrb[0].mxu0 %v424
      %v481 = vpop.f32.mrb[0].mxu0
      %v482 = vadd.f32 0.0, %v481
      %v483 = vpop.f32.mrb[0].mxu0
      %v484 = vpop.f32.mrb[0].mxu0
      %v485 = vadd.f32 0.0, %v484
      %v486 = vpop.f32.mrb[0].mxu0
      %487 = vmatprep.mubr.bf16.mxu0 0
      %488 = vmatmul.mubr.bf16.gmra.mrb[0].mxu0 %v427
      %v489 = vpop.f32.mrb[0].mxu0
      %v490 = vadd.f32 0.0, %v489
      %v491 = vpop.f32.mrb[0].mxu0
      %v492 = vpop.f32.mrb[0].mxu0
      %v493 = vadd.f32 0.0, %v492
      %v494 = vpop.f32.mrb[0].mxu0
      %495 = vmatprep.mubr.bf16.mxu0 0
      %496 = vmatmul.mubr.bf16.gmra.mrb[0].mxu0 %v430
      %v497 = vpop.f32.mrb[0].mxu0
      %v498 = vadd.f32 0.0, %v497
      %v499 = vpop.f32.mrb[0].mxu0
      %v500 = vpop.f32.mrb[0].mxu0
      %v501 = vadd.f32 0.0, %v500
      %v502 = vpop.f32.mrb[0].mxu0
      %503 = vmatprep.mubr.bf16.mxu0 0
      %504 = vmatmul.mubr.bf16.gmra.mrb[0].mxu0 %v433
      %v505 = vpop.f32.mrb[0].mxu0
      %v506 = vadd.f32 0.0, %v505
      %v507 = vpop.f32.mrb[0].mxu0
      %v508 = vpop.f32.mrb[0].mxu0
      %v509 = vpop.f32.mrb[0].mxu0
      %510 = vdwg.mxu0
      %514 = vrot.lane.b32.xlu0 %v474, 127
      %v515 = vpop.permute.xlu0 %514
      %516 = vrot.lane.b32.xlu0 %v477, 127
      %v517 = vpop.permute.xlu0 %516
      %518 = vrot.lane.b32.xlu0 %v482, 127
      %v519 = vpop.permute.xlu0 %518
      %vm523 = vcmask 580608
      %v524 = vsel %vm523, %v515, 0.0
      %v525 = vsel %vm523, %v517, 0.0
      %v526 = vsel %vm523, %v519, 0.0
      %v527 = vlaneseq
      %v528 = vshrl.u32 %v527, 7
      %v529 = vsub.s32 0, %v528
      %v530 = vrot.slane %v306, %v529
      %v531 = vmul.f32 %v524, %v530
      %v532 = vmul.f32 %v525, %v530
      %v533 = vmul.f32 %v526, %v530
      %v534 = vadd.f32 %v501, %v532
      %536 = vrot.lane.b32.xlu0 %v485, 120
      %v537 = vpop.permute.xlu0 %536
      %v539 = vadd.f32 %v493, %v537
      %v540 = vadd.f32 %v506, %v533
      %542 = vrot.lane.b32.xlu0 %v498, 120
      %v543 = vpop.permute.xlu0 %542
      %v545 = vadd.f32 %v540, %v543
      %547 = vrot.lane.b32.xlu0 %v531, 120
      %v548 = vpop.permute.xlu0 %547
      %v550 = vadd.f32 %v545, %v548
      %552 = vrot.lane.b32.xlu0 %v534, 64
      %v553 = vpop.permute.xlu0 %552
      %556 = vrot.lane.b32.xlu0 %v550, 64
      %v557 = vpop.permute.xlu0 %556
      %vm559 = vcmask 523264
      %v560 = vsel %vm559, %v490, %v553
      %v561 = vsel %vm559, %v539, %v557
      %v562 = vld [vmem:[%s5] sm:$0xff]
      %564 = vset.pattern.permute.xlu0 0
      %565 = vperm.xlu0 %564, %v562
      %v566 = vpop.permute.xlu0 %565
      %v568 = vadd.f32 %v560, %v566
      %v569 = vadd.f32 %v561, %v566
      %570 = vst [vmem:[%s304] sm:$0xff] %v568
      %571 = vst [vmem:[%s304 + $0x8] sm:$0xff] %v569
      %p572 = scmp.lt.s32.totalorder %s21, 1
      %s573 = scalar_select %p572, %s21, 1
      %p574 = scmp.lt.s32.totalorder %s22, 0
      %s575 = scalar_select %p574, %s22, 0
      %s576 = smul.addr %s575, 2
      %s577 = smul.addr %s573, 2
      %s578 = sadd.s32 %s576, %s577
      %s579 = smul.addr %s578, 8
      %s580 = scalar_lea.vmem %s6, %s579
      // Predicated region
      $region45: #{dummy_forward.1} parent=43 // pred_check
        %p581 = pneg %p187
      $region46: #{dummy_forward.1} parent=43 // pred_check_branch
        %583 = sbr.rel (%p581) target = $region48
      $region47: #{dummy_forward.1} parent=43 // pred_region
        _
      $region48: #{dummy_forward.1} parent=43 // pred_fallthru
        _
    $region44: #{dummy_forward.1} parent=5 // pred_fallthru
      _
    %p584 = scmp.le.s32.totalorder 2, %s12
    // Predicated region
    $region49: #{dummy_forward.1} parent=5 // pred_check
      %p585 = pneg %p584
    $region50: #{dummy_forward.1} parent=5 // pred_check_branch
      %587 = sbr.rel (%p585) target = $region52
    $region51: #{dummy_forward.1} parent=5 // pred_region
      %s588 = ssub.s32 %s12, 2
      // Predicated region
      $region53: #{dummy_forward.1} parent=51 // pred_check
        %p589 = pneg %p193
      $region54: #{dummy_forward.1} parent=51 // pred_check_branch
        %591 = sbr.rel (%p589) target = $region56
      $region55: #{dummy_forward.1} parent=51 // pred_region
        %p592 = scmp.lt.s32.totalorder %s23, 1
        %s593 = scalar_select %p592, %s23, 1
        %p594 = scmp.lt.s32.totalorder %s24, 0
        %s595 = scalar_select %p594, %s24, 0
        %s596 = smul.addr %s595, 2
        %s597 = smul.addr %s593, 2
        %s598 = sadd.s32 %s596, %s597
        %s599 = smul.addr %s598, 8
        %s600 = scalar_lea.vmem %s6, %s599
      $region56: #{dummy_forward.1} parent=51 // pred_fallthru
        _
    $region52: #{dummy_forward.1} parent=5 // pred_fallthru
      _
  $region6: #{dummy_forward.1} parent=0 // loop_footer
    %s16 = sadd.s32 1, %s12
  $region7: #{dummy_forward.1} parent=0 // loop_footer_branch
    %11 = sbr.rel target = $region3
  $region8: #{dummy_forward.1} parent=0 // loop_exit
    _

</llo_original>
